<compile_context>
chip_gen: v5e
topology: v5e:2x2
jax: 0.10.0
libtpu: 0.0.40
codegen_flags: <defaults>
</compile_context>

<pallas_src>
from functools import partial

import jax
import jax.numpy as jnp
from jax.experimental import pallas as pl
from jax.experimental.pallas import tpu as pltpu


def _round_up(n, m):
    return ((n + m - 1) // m) * m


# Contract the last dim of both operands: A(m,k) . B(n,k) -> (m,n).
# Same dimension numbers as q @ k^T in the official TPU attention kernels.
_NT_DIMS = (((1,), (1,)), ((), ()))


def qnet_kernel(x_ref, w1_ref, b1_ref, w2_ref, b2_ref, w3_ref, b3_ref, o_ref,
                *, ch: int, n_chunks: int):
    # Weights/biases: same block every grid step -> stay VMEM resident.
    w1 = w1_ref[...]            # (64, 4)   compute dtype (f32 or bf16)
    w2 = w2_ref[...]            # (64, 64)
    w3 = w3_ref[...]            # (8, 64)   rows 2..7 zero-padded
    b1 = b1_ref[...]            # (64, ch)  f32, pre-broadcast -> plain VPU add
    b2 = b2_ref[...]            # (64, ch)
    b3 = b3_ref[...]            # (8, ch)
    cdt = w1.dtype

    def chunk(c, carry):
        s = pl.multiple_of(c * ch, 128)
        xc = x_ref[pl.ds(s, ch), :].astype(cdt)            # (ch, 4)
        # fc1: W1(64,4) . xc^T(4,ch) via NT matmul -> batch moves onto lanes.
        h1 = jax.lax.dot_general(w1, xc, _NT_DIMS,
                                 preferred_element_type=jnp.float32)
        h1 = jnp.maximum(h1 + b1, 0.0)                     # (64, ch) f32
        # fc2
        h2 = jnp.dot(w2, h1.astype(cdt), preferred_element_type=jnp.float32)
        h2 = jnp.maximum(h2 + b2, 0.0)                     # (64, ch) f32
        # fc3 (rows 2..7 of w3/b3 are zero padding)
        o = jnp.dot(w3, h2.astype(cdt), preferred_element_type=jnp.float32) + b3
        o_ref[:, pl.ds(s, ch)] = o.astype(o_ref.dtype)     # (8, ch) lane-dense
        return carry

    jax.lax.fori_loop(0, n_chunks, chunk, 0, unroll=True)


@partial(jax.jit, static_argnames=("tb", "use_bf16"))
def qnet_forward(x, params, *, tb=2048, use_bf16=False):
    """Fused Qnet forward: x (B, 4) float32 -> (B, 2) float32."""
    w1, b1 = params["w1"], params["b1"]
    w2, b2 = params["w2"], params["b2"]
    w3, b3 = params["w3"], params["b3"]
    B, in_dim = x.shape
    hid = w1.shape[0]
    out_dim = w3.shape[0]
    sub = 8                                     # pad fc3 output rows 2 -> 8

    # ---- batch-tile / in-kernel chunk selection -----------------------------
    b128 = _round_up(B, 128)
    tb = max(128, _round_up(min(tb, b128), 128))            # enforce tb % 128 == 0
    grid_n = pl.cdiv(b128, tb)
    if grid_n == 1 and b128 >= 512:
        grid_n = 2                              # v7x: give both TensorCores work
    tb = _round_up(pl.cdiv(b128, grid_n), 128)
    grid_n = pl.cdiv(b128, tb)
    b_pad = grid_n * tb
    ch = 256 if tb % 256 == 0 else 128          # per-chunk activations fit in vregs
    n_chunks = tb // ch

    # ---- parameter prep (tiny; fused into this single jit dispatch) ---------
    cdt = jnp.bfloat16 if use_bf16 else jnp.float32
    w1c = w1.astype(cdt)
    w2c = w2.astype(cdt)
    w3c = jnp.pad(w3, ((0, sub - out_dim), (0, 0))).astype(cdt)
    b1b = jnp.broadcast_to(b1, (hid, ch)).astype(jnp.float32)
    b2b = jnp.broadcast_to(b2, (hid, ch)).astype(jnp.float32)
    b3b = jnp.broadcast_to(jnp.pad(b3, ((0, sub - out_dim), (0, 0))),
                           (sub, ch)).astype(jnp.float32)

    # x stays in its natural (B, 4) layout (no HBM transpose); only a small row
    # pad when B is not a multiple of the batch tile.
    if b_pad != B:
        x = jnp.pad(x, ((0, b_pad - B), (0, 0)))

    resident = lambda a: pl.BlockSpec(a.shape, lambda i: (0, 0))
    kernel = partial(qnet_kernel, ch=ch, n_chunks=n_chunks)

    outT = pl.pallas_call(
        kernel,
        out_shape=jax.ShapeDtypeStruct((sub, b_pad), jnp.float32),
        grid=(grid_n,),
        in_specs=[
            pl.BlockSpec((tb, in_dim), lambda i: (i, 0)),   # batch tile of x
            resident(w1c), resident(b1b),
            resident(w2c), resident(b2b),
            resident(w3c), resident(b3b),
        ],
        out_specs=pl.BlockSpec((sub, tb), lambda i: (0, i)),
        compiler_params=pltpu.CompilerParams(
            dimension_semantics=("parallel",)),
    )(x, w1c, b1b, w2c, b2b, w3c, b3b)

    return outT[:out_dim, :B].T                              # (B, 2)


def init_params(key):
    """nn.Linear-style U(-1/sqrt(fan_in), 1/sqrt(fan_in)) init.
    PyTorch layout: weight (out, in), bias (out, 1)."""
    dims = [(4, 64), (64, 64), (64, 2)]
    params = {}
    for i, (fan_in, fan_out) in enumerate(dims, start=1):
        key, kw, kb = jax.random.split(key, 3)
        bound = 1.0 / jnp.sqrt(jnp.float32(fan_in))
        params[f"w{i}"] = jax.random.uniform(
            kw, (fan_out, fan_in), jnp.float32, -bound, bound)
        params[f"b{i}"] = jax.random.uniform(
            kb, (fan_out, 1), jnp.float32, -bound, bound)
    return params


def qnet_reference(x, params):
    h1 = jnp.maximum(x @ params["w1"].T + params["b1"].T, 0.0)
    h2 = jnp.maximum(h1 @ params["w2"].T + params["b2"].T, 0.0)
    return h2 @ params["w3"].T + params["b3"].T


# TODO(synk): sample_action's epsilon-greedy uses host-side Python `random` and
# .item(); it is control flow around the forward pass, not a kernel op.

if __name__ == "__main__":
    key = jax.random.PRNGKey(0)
    key, kx1, kx2, kx3 = jax.random.split(key, 4)
    params = init_params(key)

    # 1) Small CartPole-style batch (single grid step, single chunk).
    B = 8
    x = jax.random.normal(kx1, (B, 4), jnp.float32)
    out = jax.block_until_ready(qnet_forward(x, params))
    ref = qnet_reference(x, params)
    assert out.shape == (B, 2)
    assert jnp.allclose(out, ref, atol=1e-4, rtol=1e-4)

    # 2) Non-multiple batch (row-padding path, multiple 128-lane chunks).
    B2 = 300
    x2 = jax.random.normal(kx2, (B2, 4), jnp.float32)
    out2 = jax.block_until_ready(qnet_forward(x2, params))
    ref2 = qnet_reference(x2, params)
    assert out2.shape == (B2, 2)
    assert jnp.allclose(out2, ref2, atol=1e-4, rtol=1e-4)

    # 3) Large batch: 2-step parallel grid + 256-lane chunk loop.
    B3 = 4096
    x3 = jax.random.normal(kx3, (B3, 4), jnp.float32)
    out3 = jax.block_until_ready(qnet_forward(x3, params))
    ref3 = qnet_reference(x3, params)
    assert out3.shape == (B3, 2)
    assert jnp.allclose(out3, ref3, atol=1e-4, rtol=1e-4)

    # 4) Optional bf16 MXU-input path (f32 accumulation), looser tolerance.
    out3_bf16 = jax.block_until_ready(qnet_forward(x3, params, use_bf16=True))
    assert jnp.allclose(out3_bf16, ref3, atol=5e-2, rtol=5e-2)

    print("KERNEL_OK")
</pallas_src>

<mosaic_0001>
module attributes {stable_mosaic.version = 11 : i64} {
  func.func @qnet_kernel(%arg0: i32, %arg1: memref<128x4xf32, #tpu.memory_space<vmem>>, %arg2: memref<64x4xf32, #tpu.memory_space<vmem>>, %arg3: memref<64x128xf32, #tpu.memory_space<vmem>>, %arg4: memref<64x64xf32, #tpu.memory_space<vmem>>, %arg5: memref<64x128xf32, #tpu.memory_space<vmem>>, %arg6: memref<8x64xf32, #tpu.memory_space<vmem>>, %arg7: memref<8x128xf32, #tpu.memory_space<vmem>>, %arg8: memref<8x128xf32, #tpu.memory_space<vmem>>) attributes {dimension_semantics = [#tpu.dimension_semantics<parallel>], iteration_bounds = array<i64: 1>, scalar_prefetch = 0 : i64, scratch_operands = 0 : i64, tpu.core_type = #tpu.core_type<tc>, window_params = [{transform_indices = @transform_0, window_bounds = array<i64: 128, 4>}, {pipeline_mode = #tpu.pipeline_mode<synchronous>, transform_indices = @transform_1, window_bounds = array<i64: 64, 4>}, {pipeline_mode = #tpu.pipeline_mode<synchronous>, transform_indices = @transform_2, window_bounds = array<i64: 64, 128>}, {pipeline_mode = #tpu.pipeline_mode<synchronous>, transform_indices = @transform_3, window_bounds = array<i64: 64, 64>}, {pipeline_mode = #tpu.pipeline_mode<synchronous>, transform_indices = @transform_4, window_bounds = array<i64: 64, 128>}, {pipeline_mode = #tpu.pipeline_mode<synchronous>, transform_indices = @transform_5, window_bounds = array<i64: 8, 64>}, {pipeline_mode = #tpu.pipeline_mode<synchronous>, transform_indices = @transform_6, window_bounds = array<i64: 8, 128>}, {transform_indices = @transform_7, window_bounds = array<i64: 8, 128>}]} {
    %c0 = arith.constant 0 : index
    %c0_0 = arith.constant 0 : index
    %0 = vector.load %arg2[%c0, %c0_0] : memref<64x4xf32, #tpu.memory_space<vmem>>, vector<64x4xf32>
    %c0_1 = arith.constant 0 : index
    %c0_2 = arith.constant 0 : index
    %1 = vector.load %arg4[%c0_1, %c0_2] : memref<64x64xf32, #tpu.memory_space<vmem>>, vector<64x64xf32>
    %c0_3 = arith.constant 0 : index
    %c0_4 = arith.constant 0 : index
    %2 = vector.load %arg6[%c0_3, %c0_4] : memref<8x64xf32, #tpu.memory_space<vmem>>, vector<8x64xf32>
    %c0_5 = arith.constant 0 : index
    %c0_6 = arith.constant 0 : index
    %3 = vector.load %arg3[%c0_5, %c0_6] : memref<64x128xf32, #tpu.memory_space<vmem>>, vector<64x128xf32>
    %c0_7 = arith.constant 0 : index
    %c0_8 = arith.constant 0 : index
    %4 = vector.load %arg5[%c0_7, %c0_8] : memref<64x128xf32, #tpu.memory_space<vmem>>, vector<64x128xf32>
    %c0_9 = arith.constant 0 : index
    %c0_10 = arith.constant 0 : index
    %5 = vector.load %arg7[%c0_9, %c0_10] : memref<8x128xf32, #tpu.memory_space<vmem>>, vector<8x128xf32>
    %c0_i32 = arith.constant 0 : i32
    %c128_i32 = arith.constant 128 : i32
    %6 = arith.muli %c0_i32, %c128_i32 : i32
    %7 = tpu.assume_multiple %6, 128 : i32
    %8 = arith.index_cast %7 : i32 to index
    %c0_11 = arith.constant 0 : index
    %9 = vector.load %arg1[%8, %c0_11] : memref<128x4xf32, #tpu.memory_space<vmem>>, vector<128x4xf32>
    %cst = arith.constant dense<0.000000e+00> : vector<64x128xf32>
    %10 = tpu.matmul %0, %9, %cst {dimension_numbers = #tpu.dot_dimension_numbers<[1], [1], [0], [0], [0, 0, 1, 0], [], []>} : vector<64x4xf32>, vector<128x4xf32>, vector<64x128xf32> -> vector<64x128xf32>
    %11 = arith.addf %10, %3 : vector<64x128xf32>
    %cst_12 = arith.constant 0.000000e+00 : f32
    %12 = vector.broadcast %cst_12 : f32 to vector<64x128xf32>
    %13 = arith.maximumf %11, %12 : vector<64x128xf32>
    %cst_13 = arith.constant dense<0.000000e+00> : vector<64x128xf32>
    %14 = tpu.matmul %1, %13, %cst_13 {dimension_numbers = #tpu.dot_dimension_numbers<[1], [0], [0], [1], [0, 0, 1, 1], [], []>} : vector<64x64xf32>, vector<64x128xf32>, vector<64x128xf32> -> vector<64x128xf32>
    %15 = arith.addf %14, %4 : vector<64x128xf32>
    %cst_14 = arith.constant 0.000000e+00 : f32
    %16 = vector.broadcast %cst_14 : f32 to vector<64x128xf32>
    %17 = arith.maximumf %15, %16 : vector<64x128xf32>
    %cst_15 = arith.constant dense<0.000000e+00> : vector<8x128xf32>
    %18 = tpu.matmul %2, %17, %cst_15 {dimension_numbers = #tpu.dot_dimension_numbers<[1], [0], [0], [1], [0, 0, 1, 1], [], []>} : vector<8x64xf32>, vector<64x128xf32>, vector<8x128xf32> -> vector<8x128xf32>
    %19 = arith.addf %18, %5 : vector<8x128xf32>
    %c0_16 = arith.constant 0 : index
    %20 = arith.index_cast %7 : i32 to index
    %21 = vector.load %arg8[%c0_16, %20] : memref<8x128xf32, #tpu.memory_space<vmem>>, vector<8x128xf32>
    tpu.vector_store %arg8[%c0_16, %20], %19 {strides = array<i32>} : memref<8x128xf32, #tpu.memory_space<vmem>>, vector<8x128xf32>,
    %c1_i32 = arith.constant 1 : i32
    return
  }
  func.func @transform_0(%arg0: i32) -> (i32, i32) {
    %c0_i32 = arith.constant 0 : i32
    %c0_i32_0 = arith.constant 0 : i32
    return %arg0, %c0_i32 : i32, i32
  }
  func.func @transform_1(%arg0: i32) -> (i32, i32) {
    %c0_i32 = arith.constant 0 : i32
    %c0_i32_0 = arith.constant 0 : i32
    %c0_i32_1 = arith.constant 0 : i32
    return %c0_i32, %c0_i32_0 : i32, i32
  }
  func.func @transform_2(%arg0: i32) -> (i32, i32) {
    %c0_i32 = arith.constant 0 : i32
    %c0_i32_0 = arith.constant 0 : i32
    %c0_i32_1 = arith.constant 0 : i32
    return %c0_i32, %c0_i32_0 : i32, i32
  }
  func.func @transform_3(%arg0: i32) -> (i32, i32) {
    %c0_i32 = arith.constant 0 : i32
    %c0_i32_0 = arith.constant 0 : i32
    %c0_i32_1 = arith.constant 0 : i32
    return %c0_i32, %c0_i32_0 : i32, i32
  }
  func.func @transform_4(%arg0: i32) -> (i32, i32) {
    %c0_i32 = arith.constant 0 : i32
    %c0_i32_0 = arith.constant 0 : i32
    %c0_i32_1 = arith.constant 0 : i32
    return %c0_i32, %c0_i32_0 : i32, i32
  }
  func.func @transform_5(%arg0: i32) -> (i32, i32) {
    %c0_i32 = arith.constant 0 : i32
    %c0_i32_0 = arith.constant 0 : i32
    %c0_i32_1 = arith.constant 0 : i32
    return %c0_i32, %c0_i32_0 : i32, i32
  }
  func.func @transform_6(%arg0: i32) -> (i32, i32) {
    %c0_i32 = arith.constant 0 : i32
    %c0_i32_0 = arith.constant 0 : i32
    %c0_i32_1 = arith.constant 0 : i32
    return %c0_i32, %c0_i32_0 : i32, i32
  }
  func.func @transform_7(%arg0: i32) -> (i32, i32) {
    %c0_i32 = arith.constant 0 : i32
    %c0_i32_0 = arith.constant 0 : i32
    return %c0_i32, %arg0 : i32, i32
  }
}

</mosaic_0001>

<llo_original>
// kernel: qnet_forward.1
$region0: #{qnet_forward.1}
  #allocation0 [shape = 'u32[]', space=smem, size = 0x4, offset = 0x4, fixed_abs, tag = 'smem constant byte address 0x4 - core index']
  #allocation1 [shape = 'u32[72,128]{1,0:T(1,128)}', space=vmem, size = 0x9000, scoped, tag = 'internal scratch']
  %s0 = inlined_call_operand.vmem [shape: f32[128,4], index: 0, kind: input, shape index: {}]
  %s1 = inlined_call_operand.vmem [shape: f32[64,4], index: 1, kind: input, shape index: {}]
  %s2 = inlined_call_operand.vmem [shape: f32[64,128], index: 2, kind: input, shape index: {}]
  %s3 = inlined_call_operand.vmem [shape: f32[64,64], index: 3, kind: input, shape index: {}]
  %s4 = inlined_call_operand.vmem [shape: f32[64,128], index: 4, kind: input, shape index: {}]
  %s5 = inlined_call_operand.vmem [shape: f32[8,64], index: 5, kind: input, shape index: {}]
  %s6 = inlined_call_operand.vmem [shape: f32[8,128], index: 6, kind: input, shape index: {}]
  %s7 = inlined_call_operand.vmem [shape: f32[8,128], index: 7, kind: output, shape index: {}]
  %s8 = sld [smem:[#allocation0]]
  $region38: #{qnet_forward.1} parent=0
    _
  %s10 = ssub.s32 1, %s8
  %s11 = scalar_select 0, %s10, %s8
  // Predicated region
  $region2: #{qnet_forward.1} parent=0 // pred_check
    _
  $region3: #{qnet_forward.1} parent=0 // pred_check_branch
    %13 = sbr.rel (0) target = $region5
  $region4: #{qnet_forward.1} parent=0 // pred_region
    _
  $region5: #{qnet_forward.1} parent=0 // pred_fallthru
    _
  // Predicated region
  $region6: #{qnet_forward.1} parent=0 // pred_check
    _
  $region7: #{qnet_forward.1} parent=0 // pred_check_branch
    %15 = sbr.rel (0) target = $region9
  $region8: #{qnet_forward.1} parent=0 // pred_region
    _
  $region9: #{qnet_forward.1} parent=0 // pred_fallthru
    _
  // Predicated region
  $region10: #{qnet_forward.1} parent=0 // pred_check
    _
  $region11: #{qnet_forward.1} parent=0 // pred_check_branch
    %17 = sbr.rel (0) target = $region13
  $region12: #{qnet_forward.1} parent=0 // pred_region
    _
  $region13: #{qnet_forward.1} parent=0 // pred_fallthru
    _
  // Predicated region
  $region14: #{qnet_forward.1} parent=0 // pred_check
    _
  $region15: #{qnet_forward.1} parent=0 // pred_check_branch
    %19 = sbr.rel (0) target = $region17
  $region16: #{qnet_forward.1} parent=0 // pred_region
    _
  $region17: #{qnet_forward.1} parent=0 // pred_fallthru
    _
  // Predicated region
  $region18: #{qnet_forward.1} parent=0 // pred_check
    _
  $region19: #{qnet_forward.1} parent=0 // pred_check_branch
    %21 = sbr.rel (0) target = $region21
  $region20: #{qnet_forward.1} parent=0 // pred_region
    _
  $region21: #{qnet_forward.1} parent=0 // pred_fallthru
    _
  // Predicated region
  $region22: #{qnet_forward.1} parent=0 // pred_check
    _
  $region23: #{qnet_forward.1} parent=0 // pred_check_branch
    %23 = sbr.rel (0) target = $region25
  $region24: #{qnet_forward.1} parent=0 // pred_region
    _
  $region25: #{qnet_forward.1} parent=0 // pred_fallthru
    _
  // Predicated region
  $region26: #{qnet_forward.1} parent=0 // pred_check
    _
  $region27: #{qnet_forward.1} parent=0 // pred_check_branch
    %25 = sbr.rel (0) target = $region29
  $region28: #{qnet_forward.1} parent=0 // pred_region
    _
  $region29: #{qnet_forward.1} parent=0 // pred_fallthru
    _
  %v26 = vld [vmem:[%s1] sm:$0xff]
  %v27 = vld [vmem:[%s1 + $0x8] sm:$0xff]
  %v28 = vld [vmem:[%s1 + $0x10] sm:$0xff]
  %v29 = vld [vmem:[%s1 + $0x18] sm:$0xff]
  %v30 = vld [vmem:[%s1 + $0x20] sm:$0xff]
  %v31 = vld [vmem:[%s1 + $0x28] sm:$0xff]
  %v32 = vld [vmem:[%s1 + $0x30] sm:$0xff]
  %v33 = vld [vmem:[%s1 + $0x38] sm:$0xff]
  %v34 = vld [vmem:[%s3] sm:$0xff]
  %v35 = vld [vmem:[%s3 + $0x8] sm:$0xff]
  %v36 = vld [vmem:[%s3 + $0x10] sm:$0xff]
  %v37 = vld [vmem:[%s3 + $0x18] sm:$0xff]
  %v38 = vld [vmem:[%s3 + $0x20] sm:$0xff]
  %v39 = vld [vmem:[%s3 + $0x28] sm:$0xff]
  %v40 = vld [vmem:[%s3 + $0x30] sm:$0xff]
  %v41 = vld [vmem:[%s3 + $0x38] sm:$0xff]
  %v42 = vld [vmem:[%s5] sm:$0xff]
  %v43 = vld [vmem:[%s2] sm:$0xff]
  %v44 = vld [vmem:[%s2 + $0x8] sm:$0xff]
  %v45 = vld [vmem:[%s2 + $0x10] sm:$0xff]
  %v46 = vld [vmem:[%s2 + $0x18] sm:$0xff]
  %v47 = vld [vmem:[%s2 + $0x20] sm:$0xff]
  %v48 = vld [vmem:[%s2 + $0x28] sm:$0xff]
  %v49 = vld [vmem:[%s2 + $0x30] sm:$0xff]
  %v50 = vld [vmem:[%s2 + $0x38] sm:$0xff]
  %v51 = vld [vmem:[%s4] sm:$0xff]
  %v52 = vld [vmem:[%s4 + $0x8] sm:$0xff]
  %v53 = vld [vmem:[%s4 + $0x10] sm:$0xff]
  %v54 = vld [vmem:[%s4 + $0x18] sm:$0xff]
  %v55 = vld [vmem:[%s4 + $0x20] sm:$0xff]
  %v56 = vld [vmem:[%s4 + $0x28] sm:$0xff]
  %v57 = vld [vmem:[%s4 + $0x30] sm:$0xff]
  %v58 = vld [vmem:[%s4 + $0x38] sm:$0xff]
  %v59 = vld [vmem:[%s6] sm:$0xff]
  %v60 = vld [vmem:[%s0] sm:$0xff]
  %v61 = vld [vmem:[%s0 + $0x8] sm:$0xff]
  %v62 = vld [vmem:[%s0 + $0x10] sm:$0xff]
  %v63 = vld [vmem:[%s0 + $0x18] sm:$0xff]
  %v64 = vld [vmem:[%s0 + $0x20] sm:$0xff]
  %v65 = vld [vmem:[%s0 + $0x28] sm:$0xff]
  %v66 = vld [vmem:[%s0 + $0x30] sm:$0xff]
  %v67 = vld [vmem:[%s0 + $0x38] sm:$0xff]
  %v68 = vld [vmem:[%s0 + $0x40] sm:$0xff]
  %v69 = vld [vmem:[%s0 + $0x48] sm:$0xff]
  %v70 = vld [vmem:[%s0 + $0x50] sm:$0xff]
  %v71 = vld [vmem:[%s0 + $0x58] sm:$0xff]
  %v72 = vld [vmem:[%s0 + $0x60] sm:$0xff]
  %v73 = vld [vmem:[%s0 + $0x68] sm:$0xff]
  %v74 = vld [vmem:[%s0 + $0x70] sm:$0xff]
  %v75 = vld [vmem:[%s0 + $0x78] sm:$0xff]
  %vm76 = vcmask 31744
  %v78 = vsel %vm76, %v26, 0
  %v81 = vsel %vm76, %v27, 0
  %v84 = vsel %vm76, %v28, 0
  %v87 = vsel %vm76, %v29, 0
  %v90 = vsel %vm76, %v30, 0
  %v93 = vsel %vm76, %v31, 0
  %v96 = vsel %vm76, %v32, 0
  %v99 = vsel %vm76, %v33, 0
  %v102 = vsel %vm76, %v60, 0
  %v105 = vsel %vm76, %v61, 0
  %v108 = vsel %vm76, %v62, 0
  %v111 = vsel %vm76, %v63, 0
  %v114 = vsel %vm76, %v64, 0
  %v117 = vsel %vm76, %v65, 0
  %v120 = vsel %vm76, %v66, 0
  %v123 = vsel %vm76, %v67, 0
  %v126 = vsel %vm76, %v68, 0
  %v129 = vsel %vm76, %v69, 0
  %v132 = vsel %vm76, %v70, 0
  %v135 = vsel %vm76, %v71, 0
  %v138 = vsel %vm76, %v72, 0
  %v141 = vsel %vm76, %v73, 0
  %v144 = vsel %vm76, %v74, 0
  %v147 = vsel %vm76, %v75, 0
  %149 = vmatpush.xpose.msra.mxu0 %v147
  %150 = vmatpush.xpose.msra.mxu0 %v144
  %151 = vmatpush.xpose.msra.mxu0 %v141
  %152 = vmatpush.xpose.msra.mxu0 %v138
  %153 = vmatpush.xpose.msra.mxu0 %v135
  %154 = vmatpush.xpose.msra.mxu0 %v132
  %155 = vmatpush.xpose.msra.mxu0 %v129
  %156 = vmatpush.xpose.msra.mxu0 %v126
  %157 = vmatpush.xpose.msra.mxu0 %v123
  %158 = vmatpush.xpose.msra.mxu0 %v120
  %159 = vmatpush.xpose.msra.mxu0 %v117
  %160 = vmatpush.xpose.msra.mxu0 %v114
  %161 = vmatpush.xpose.msra.mxu0 %v111
  %162 = vmatpush.xpose.msra.mxu0 %v108
  %163 = vmatpush.xpose.msra.mxu0 %v105
  %164 = vmatpush.xpose.msra.mxu0 %v102
  %165 = vmatmul.f32.gmra.mxu0 %v78
  %v166 = vpop.f32.mrf.mxu0
  %v167 = vadd.f32 %v43, %v166
  %168 = vmatmul.f32.gmra.mxu0 %v81
  %v169 = vpop.f32.mrf.mxu0
  %v170 = vadd.f32 %v44, %v169
  %171 = vmatmul.f32.gmra.mxu0 %v84
  %v172 = vpop.f32.mrf.mxu0
  %v173 = vadd.f32 %v45, %v172
  %174 = vmatmul.f32.gmra.mxu0 %v87
  %v175 = vpop.f32.mrf.mxu0
  %v176 = vadd.f32 %v46, %v175
  %177 = vmatmul.f32.gmra.mxu0 %v90
  %v178 = vpop.f32.mrf.mxu0
  %v179 = vadd.f32 %v47, %v178
  %180 = vmatmul.f32.gmra.mxu0 %v93
  %v181 = vpop.f32.mrf.mxu0
  %v182 = vadd.f32 %v48, %v181
  %183 = vmatmul.f32.gmra.mxu0 %v96
  %v184 = vpop.f32.mrf.mxu0
  %v185 = vadd.f32 %v49, %v184
  %186 = vmatmul.f32.gmra.mxu0 %v99
  %v187 = vpop.f32.mrf.mxu0
  %v188 = vadd.f32 %v50, %v187
  %189 = vdwg.mxu0
  %v190 = vmax.f32 %v167, 0.0
  %v191 = vmax.f32 %v170, 0.0
  %v192 = vmax.f32 %v173, 0.0
  %v193 = vmax.f32 %v176, 0.0
  %v194 = vmax.f32 %v179, 0.0
  %v195 = vmax.f32 %v182, 0.0
  %v196 = vmax.f32 %v185, 0.0
  %v197 = vmax.f32 %v188, 0.0
  %vm198 = vcmask 523264
  %v200 = vsel %vm198, %v34, 0
  %v203 = vsel %vm198, %v35, 0
  %v206 = vsel %vm198, %v36, 0
  %v209 = vsel %vm198, %v37, 0
  %v212 = vsel %vm198, %v38, 0
  %v215 = vsel %vm198, %v39, 0
  %v218 = vsel %vm198, %v40, 0
  %v221 = vsel %vm198, %v41, 0
  %223 = vmatpush.msra.mxu0 0.0
  %224 = vmatpush.msra.mxu0 0.0
  %225 = vmatpush.msra.mxu0 0.0
  %226 = vmatpush.msra.mxu0 0.0
  %227 = vmatpush.msra.mxu0 0.0
  %228 = vmatpush.msra.mxu0 0.0
  %229 = vmatpush.msra.mxu0 0.0
  %230 = vmatpush.msra.mxu0 0.0
  %231 = vmatpush.msra.mxu0 %v197
  %232 = vmatpush.msra.mxu0 %v196
  %233 = vmatpush.msra.mxu0 %v195
  %234 = vmatpush.msra.mxu0 %v194
  %235 = vmatpush.msra.mxu0 %v193
  %236 = vmatpush.msra.mxu0 %v192
  %237 = vmatpush.msra.mxu0 %v191
  %238 = vmatpush.msra.mxu0 %v190
  %239 = vmatmul.f32.gmra.mxu0 %v200
  %v240 = vpop.f32.mrf.mxu0
  %v241 = vadd.f32 %v51, %v240
  %242 = vmatmul.f32.gmra.mxu0 %v203
  %v243 = vpop.f32.mrf.mxu0
  %v244 = vadd.f32 %v52, %v243
  %245 = vmatmul.f32.gmra.mxu0 %v206
  %v246 = vpop.f32.mrf.mxu0
  %v247 = vadd.f32 %v53, %v246
  %248 = vmatmul.f32.gmra.mxu0 %v209
  %v249 = vpop.f32.mrf.mxu0
  %v250 = vadd.f32 %v54, %v249
  %251 = vmatmul.f32.gmra.mxu0 %v212
  %v252 = vpop.f32.mrf.mxu0
  %v253 = vadd.f32 %v55, %v252
  %254 = vmatmul.f32.gmra.mxu0 %v215
  %v255 = vpop.f32.mrf.mxu0
  %v256 = vadd.f32 %v56, %v255
  %257 = vmatmul.f32.gmra.mxu0 %v218
  %v258 = vpop.f32.mrf.mxu0
  %v259 = vadd.f32 %v57, %v258
  %260 = vmatmul.f32.gmra.mxu0 %v221
  %v261 = vpop.f32.mrf.mxu0
  %v262 = vadd.f32 %v58, %v261
  %263 = vdwg.mxu0
  %v264 = vmax.f32 %v241, 0.0
  %v265 = vmax.f32 %v244, 0.0
  %v266 = vmax.f32 %v247, 0.0
  %v267 = vmax.f32 %v250, 0.0
  %v268 = vmax.f32 %v253, 0.0
  %v269 = vmax.f32 %v256, 0.0
  %v270 = vmax.f32 %v259, 0.0
  %v271 = vmax.f32 %v262, 0.0
  %v273 = vsel %vm198, %v42, 0
  %275 = vmatpush.msra.mxu0 0.0
  %276 = vmatpush.msra.mxu0 0.0
  %277 = vmatpush.msra.mxu0 0.0
  %278 = vmatpush.msra.mxu0 0.0
  %279 = vmatpush.msra.mxu0 0.0
  %280 = vmatpush.msra.mxu0 0.0
  %281 = vmatpush.msra.mxu0 0.0
  %282 = vmatpush.msra.mxu0 0.0
  %283 = vmatpush.msra.mxu0 %v271
  %284 = vmatpush.msra.mxu0 %v270
  %285 = vmatpush.msra.mxu0 %v269
  %286 = vmatpush.msra.mxu0 %v268
  %287 = vmatpush.msra.mxu0 %v267
  %288 = vmatpush.msra.mxu0 %v266
  %289 = vmatpush.msra.mxu0 %v265
  %290 = vmatpush.msra.mxu0 %v264
  %291 = vmatmul.f32.gmra.mxu0 %v273
  %v292 = vpop.f32.mrf.mxu0
  %v293 = vadd.f32 %v59, %v292
  %294 = vdwg.mxu0
  %295 = vst [vmem:[%s7] sm:$0xff] %v293
  // Predicated region
  $region30: #{qnet_forward.1} parent=0 // pred_check
    _
  $region31: #{qnet_forward.1} parent=0 // pred_check_branch
    %297 = sbr.rel (0) target = $region33
  $region32: #{qnet_forward.1} parent=0 // pred_region
    _
  $region33: #{qnet_forward.1} parent=0 // pred_fallthru
    _
  // Predicated region
  $region34: #{qnet_forward.1} parent=0 // pred_check
    _
  $region35: #{qnet_forward.1} parent=0 // pred_check_branch
    %299 = sbr.rel (0) target = $region37
  $region36: #{qnet_forward.1} parent=0 // pred_region
    _
  $region37: #{qnet_forward.1} parent=0 // pred_fallthru
    _

</llo_original>
